<compile_context>
chip_gen: v7x
topology: tpu7x:2x2x1
jax: 0.10.0
libtpu: 0.0.40
codegen_flags: <defaults>
</compile_context>

<pallas_src>
import jax
import jax.numpy as jnp
from jax.experimental import pallas as pl
from jax.experimental.pallas import tpu as pltpu


# ---------------------------------------------------------------------------
# Sizes
# ---------------------------------------------------------------------------
def _round_up(n, m):
    return ((n + m - 1) // m) * m


IN_DIM = 2          # Linear(2, H)
H = 200             # hidden width (module default)
OUT_DIM = 1         # bw=True -> out_dim = 1

LANE = 128          # lane multiple
H_P = _round_up(H, LANE)          # 256
TB = 128            # batch tile for the batched path (lane-dense)

_SMEM_SPEC = pl.BlockSpec(memory_space=pltpu.MemorySpace.SMEM)


# ---------------------------------------------------------------------------
# One-time parameter preparation (hoisted out of the per-call path)
#
# Packed layout (f32):
#   packed  (4, H_P):  row0 = W0[:,0], row1 = W0[:,1],
#                      row2 = b0  with packed[2, H]   = 1.0   (bias lane)
#                      row3 = W1  with packed[3, H]   = b1
#   packedT (H_P, 4):  transpose of the above, for the batched (lane-batch)
#                      kernel (hidden units on sublanes).
# Padded lanes/rows H+1 .. H_P-1 are zero in every row -> contribute nothing.
# ---------------------------------------------------------------------------
def prepare_params(params):
    """torch-layout params (w0 (H,2), b0 (H,), w1 (1,H), b1 (1,)) -> TPU tiles."""
    w0, b0, w1, b1 = params
    w0 = jnp.asarray(w0, jnp.float32)
    b0 = jnp.asarray(b0, jnp.float32).reshape(H)
    w1 = jnp.asarray(w1, jnp.float32).reshape(H)
    b1 = jnp.asarray(b1, jnp.float32).reshape(-1)[0]

    packed = jnp.zeros((4, H_P), jnp.float32)
    packed = packed.at[0, :H].set(w0[:, 0])
    packed = packed.at[1, :H].set(w0[:, 1])
    packed = packed.at[2, :H].set(b0)
    packed = packed.at[2, H].set(1.0)     # bias lane: relu(1.0) == 1.0
    packed = packed.at[3, :H].set(w1)
    packed = packed.at[3, H].set(b1)      # 1.0 * b1 folded into the reduction
    return packed, packed.T               # (4, H_P), (H_P, 4)


# ---------------------------------------------------------------------------
# Single-sample kernel (exact module semantics)
#   x_ref : (2,)      f32  SMEM   (flattened input)
#   w_ref : (4, H_P)  f32  VMEM   (packed weights, see prepare_params)
#   o_ref : (1, 1)    f32  VMEM
# ---------------------------------------------------------------------------
def _relu_net_kernel(x_ref, w_ref, o_ref):
    x0 = x_ref[0]
    x1 = x_ref[1]

    # Layer 1 on the VPU: two scalar-vector MACs over the real K=2 rows.
    h = jnp.maximum(x0 * w_ref[0:1, :] + x1 * w_ref[1:2, :] + w_ref[2:3, :], 0.0)

    # Layer 2 as a cross-lane reduction (OUT_DIM == 1); bias lane carries b1,
    # zero-padded lanes contribute nothing.
    y = jnp.sum(h * w_ref[3:4, :], axis=-1, keepdims=True)      # (1, 1)
    o_ref[...] = jax.nn.sigmoid(y)


# ---------------------------------------------------------------------------
# Batched kernel: B independent samples, batch on the LANE axis.
#   xT_ref : (2, TB)    f32  VMEM   (x0 row, x1 row for TB samples)
#   wT_ref : (H_P, 4)   f32  VMEM   (VMEM-resident: constant index_map)
#   o_ref  : (1, TB)    f32  VMEM   (lane-dense outputs)
# ---------------------------------------------------------------------------
def _relu_net_batched_kernel(xT_ref, wT_ref, o_ref):
    x0 = xT_ref[0:1, :]            # (1, TB)
    x1 = xT_ref[1:2, :]            # (1, TB)
    w0a = wT_ref[:, 0:1]           # (H_P, 1)
    w0b = wT_ref[:, 1:2]
    b0 = wT_ref[:, 2:3]
    w1 = wT_ref[:, 3:4]

    h = jnp.maximum(w0a * x0 + w0b * x1 + b0, 0.0)               # (H_P, TB)
    y = jnp.sum(h * w1, axis=0, keepdims=True)                   # (1, TB)
    o_ref[...] = jax.nn.sigmoid(y)


def _vmem_spec(shape):
    # whole-array block, gridless call
    return pl.BlockSpec(shape, lambda: (0,) * len(shape))


# ---------------------------------------------------------------------------
# Forward (single sample — matches the PyTorch module exactly)
# ---------------------------------------------------------------------------
_COST = pl.CostEstimate(
    flops=H * (2 * IN_DIM + 1) + 2 * H,     # layer-1 MAC+relu, layer-2 dot
    transcendentals=1,                       # sigmoid
    bytes_accessed=4 * H_P * 4 + (IN_DIM + 1) * 4,
)


def relu_net_forward(x, prepared):
    """x: any shape that flattens to (2,). Returns shape (1,) float32."""
    packed, _ = prepared
    assert packed.shape == (4, H_P), "pass the result of prepare_params()"

    xf = jnp.ravel(x).astype(jnp.float32)                        # (2,) -> SMEM
    assert xf.shape == (IN_DIM,), "ReLUNet expects an input that flattens to 2 elems"

    out = pl.pallas_call(
        _relu_net_kernel,
        out_shape=jax.ShapeDtypeStruct((1, 1), jnp.float32),
        in_specs=[
            _SMEM_SPEC,                  # x       (2,)     SMEM
            _vmem_spec((4, H_P)),        # packed  (4, 256) VMEM
        ],
        out_specs=_vmem_spec((1, 1)),
        cost_estimate=_COST,
    )(xf, packed)

    return out[0]                        # (1,)


# ---------------------------------------------------------------------------
# Forward (batched — the order-of-magnitude throughput path)
# ---------------------------------------------------------------------------
def relu_net_forward_batched(xb, prepared):
    """xb: (B, 2). Returns (B,) float32 = sigmoid head per sample."""
    _, packed_t = prepared
    assert packed_t.shape == (H_P, 4), "pass the result of prepare_params()"

    B = xb.shape[0]
    xb = jnp.asarray(xb, jnp.float32).reshape(B, IN_DIM)
    b_pad = _round_up(B, TB)
    xT = jnp.zeros((IN_DIM, b_pad), jnp.float32).at[:, :B].set(xb.T)

    grid = (b_pad // TB,)
    out = pl.pallas_call(
        _relu_net_batched_kernel,
        out_shape=jax.ShapeDtypeStruct((1, b_pad), jnp.float32),
        grid=grid,
        in_specs=[
            pl.BlockSpec((IN_DIM, TB), lambda i: (0, i)),   # x tile per grid step
            pl.BlockSpec((H_P, 4), lambda i: (0, 0)),       # weights stay resident
        ],
        out_specs=pl.BlockSpec((1, TB), lambda i: (0, i)),  # lane-dense outputs
        compiler_params=pltpu.CompilerParams(
            dimension_semantics=("parallel",)),             # v7x: shard over 2 TCs
        cost_estimate=pl.CostEstimate(
            flops=(H * (2 * IN_DIM + 1) + 2 * H) * b_pad,
            transcendentals=b_pad,
            bytes_accessed=4 * H_P * 4 + b_pad * (IN_DIM + 1) * 4,
        ),
    )(xT, packed_t)

    return out[0, :B]                    # (B,)


# ---------------------------------------------------------------------------
# Deterministic parameter init (mimics torch.nn.Linear default: U(-k, k))
# ---------------------------------------------------------------------------
def init_params(key):
    k0, k1, k2, k3 = jax.random.split(key, 4)
    lim0 = 1.0 / jnp.sqrt(IN_DIM)
    lim1 = 1.0 / jnp.sqrt(H)
    w0 = jax.random.uniform(k0, (H, IN_DIM), jnp.float32, -lim0, lim0)
    b0 = jax.random.uniform(k1, (H,), jnp.float32, -lim0, lim0)
    w1 = jax.random.uniform(k2, (OUT_DIM, H), jnp.float32, -lim1, lim1)
    b1 = jax.random.uniform(k3, (OUT_DIM,), jnp.float32, -lim1, lim1)
    return w0, b0, w1, b1


def _reference(x, params):
    w0, b0, w1, b1 = params
    h = jnp.maximum(jnp.ravel(x) @ w0.T + b0, 0.0)
    return jax.nn.sigmoid(h @ w1.T + b1)


if __name__ == "__main__":
    key = jax.random.PRNGKey(0)
    pkey, xkey, bkey = jax.random.split(key, 3)

    params = init_params(pkey)
    prepared = prepare_params(params)   # one-time weight prep (hoisted)

    # --- single-sample path: module flattens its input to a length-2 vector ---
    x = jax.random.normal(xkey, (1, 2), jnp.float32)
    out = jax.block_until_ready(relu_net_forward(x, prepared))
    ref = _reference(x, params)
    assert out.shape == (OUT_DIM,), out.shape
    assert jnp.allclose(out, ref, atol=1e-5, rtol=1e-5), (out, ref)

    # --- batched throughput path: 8 independent 2-vectors ---
    xb = jax.random.normal(bkey, (8, 2), jnp.float32)
    outb = jax.block_until_ready(relu_net_forward_batched(xb, prepared))
    refb = jax.vmap(lambda xi: _reference(xi, params))(xb).reshape(-1)
    assert outb.shape == (8,), outb.shape
    assert jnp.allclose(outb, refb, atol=1e-5, rtol=1e-5), (outb, refb)

    print("KERNEL_OK")
</pallas_src>

<mosaic_0001>
module attributes {stable_mosaic.version = 11 : i64} {
  func.func @_relu_net_kernel(%arg0: memref<2xf32, #tpu.memory_space<smem>>, %arg1: memref<4x256xf32, #tpu.memory_space<vmem>>, %arg2: memref<1x1xf32, #tpu.memory_space<vmem>>) attributes {dimension_semantics = [], scalar_prefetch = 0 : i64, scratch_operands = 0 : i64, tpu.core_type = #tpu.core_type<tc>} {
    %c0 = arith.constant 0 : index
    %0 = memref.load %arg0[%c0] : memref<2xf32, #tpu.memory_space<smem>>
    %c1 = arith.constant 1 : index
    %1 = memref.load %arg0[%c1] : memref<2xf32, #tpu.memory_space<smem>>
    %c0_0 = arith.constant 0 : index
    %c0_1 = arith.constant 0 : index
    %2 = vector.load %arg1[%c0_0, %c0_1] : memref<4x256xf32, #tpu.memory_space<vmem>>, vector<1x256xf32>
    %3 = vector.broadcast %0 : f32 to vector<1x256xf32>
    %4 = arith.mulf %3, %2 : vector<1x256xf32>
    %c1_2 = arith.constant 1 : index
    %c0_3 = arith.constant 0 : index
    %5 = vector.load %arg1[%c1_2, %c0_3] : memref<4x256xf32, #tpu.memory_space<vmem>>, vector<1x256xf32>
    %6 = vector.broadcast %1 : f32 to vector<1x256xf32>
    %7 = arith.mulf %6, %5 : vector<1x256xf32>
    %8 = arith.addf %4, %7 : vector<1x256xf32>
    %c2 = arith.constant 2 : index
    %c0_4 = arith.constant 0 : index
    %9 = vector.load %arg1[%c2, %c0_4] : memref<4x256xf32, #tpu.memory_space<vmem>>, vector<1x256xf32>
    %10 = arith.addf %8, %9 : vector<1x256xf32>
    %cst = arith.constant 0.000000e+00 : f32
    %11 = vector.broadcast %cst : f32 to vector<1x256xf32>
    %12 = arith.maximumf %10, %11 : vector<1x256xf32>
    %c3 = arith.constant 3 : index
    %c0_5 = arith.constant 0 : index
    %13 = vector.load %arg1[%c3, %c0_5] : memref<4x256xf32, #tpu.memory_space<vmem>>, vector<1x256xf32>
    %14 = arith.mulf %12, %13 : vector<1x256xf32>
    %cst_6 = arith.constant dense<0.000000e+00> : vector<1xf32>
    %15 = vector.multi_reduction <add>, %14, %cst_6 [1] : vector<1x256xf32> to vector<1xf32>
    %16 = vector.shape_cast %15 : vector<1xf32> to vector<1x1xf32>
    %17 = arith.negf %16 : vector<1x1xf32>
    %18 = math.exp %17 : vector<1x1xf32>
    %cst_7 = arith.constant 1.000000e+00 : f32
    %19 = vector.broadcast %cst_7 : f32 to vector<1x1xf32>
    %20 = arith.addf %19, %18 : vector<1x1xf32>
    %21 = arith.divf %19, %20 : vector<1x1xf32>
    %c0_8 = arith.constant 0 : index
    %c0_9 = arith.constant 0 : index
    %22 = vector.load %arg2[%c0_8, %c0_9] : memref<1x1xf32, #tpu.memory_space<vmem>>, vector<1x1xf32>
    tpu.vector_store %arg2[%c0_8, %c0_9], %21 {strides = array<i32>} : memref<1x1xf32, #tpu.memory_space<vmem>>, vector<1x1xf32>,
    return
  }
}

</mosaic_0001>

<llo_original>
// kernel: tpu_custom_call.1
$region0: #{tpu_custom_call.1}
  #allocation0 [shape = 'u32[]', space=smem, size = 0x4, offset = 0x4, fixed_abs, tag = 'smem constant byte address 0x4 - core index']
  #allocation1 [shape = 'u32[144,128]{1,0:T(1,128)}', space=vmem, size = 0x12000, scoped, tag = 'internal scratch']
  %s0 = inlined_call_operand.hbm [shape: f32[2], index: 0, kind: input, shape index: {}]
  %s1 = inlined_call_operand.hbm [shape: f32[4,256], index: 1, kind: input, shape index: {}]
  %s2 = inlined_call_operand.hbm [shape: f32[1,1], index: 2, kind: output, shape index: {}]
  %s3 = sld [smem:[#allocation0]]
  $region26: #{tpu_custom_call.1} parent=0
    _
  %s5 = ssub.s32 1, %s3
  %s6 = scalar_select 0, %s5, %s3
  $region1: #{tpu_custom_call.1} parent=0
    #allocation2 [shape = 'u8[512]{0}', space=smem, size = 0x200, scoped, tag = 'input window, operand 0, single buffered']
    #allocation3 [shape = 's32[1]{0}', space=sflag, size = 0x4, scoped, tag = 'scoped memory for tpu_custom_call.1']
    #allocation4 [shape = 's32[1]{0}', space=sflag, size = 0x4, scoped, tag = 'scoped memory for tpu_custom_call.1']
    #allocation5 [shape = 's32[1]{0}', space=sflag, size = 0x4, scoped, tag = 'scoped memory for tpu_custom_call.1']
    #allocation6 [shape = 'u8[4096]{0}', space=vmem, size = 0x1000, scoped, tag = 'input window, operand 1, single buffered']
    #allocation7 [shape = 'u8[512]{0}', space=vmem, size = 0x400, scoped, tag = 'output window, operand 0, single buffered']
    %7 = vsyncpa [#allocation5], 0
    %8 = vsyncpa [#allocation3], 0
    %9 = vsyncpa [#allocation4], 0
    // Predicated region
    $region2: #{tpu_custom_call.1} parent=1 // pred_check
      _
    $region3: #{tpu_custom_call.1} parent=1 // pred_check_branch
      %11 = sbr.rel (0) target = $region5
    $region4: #{tpu_custom_call.1} parent=1 // pred_region
      %s13 = ssub.s32 16, 16
      %14 = vsyncadd [#allocation5], %s13
      %17 = dma.hbm_to_smem %s0, 16, [#allocation2], [#allocation5]
    $region5: #{tpu_custom_call.1} parent=1 // pred_fallthru
      _
    // Predicated region
    $region6: #{tpu_custom_call.1} parent=1 // pred_check
      _
    $region7: #{tpu_custom_call.1} parent=1 // pred_check_branch
      %19 = sbr.rel (0) target = $region9
    $region8: #{tpu_custom_call.1} parent=1 // pred_region
      %s21 = ssub.s32 128, 128
      %22 = vsyncadd [#allocation3], %s21
      %s24 = sshll.u32 [#allocation6], 4
      %s25 = int_to_ptr.vmem [resolvable:$true] %s24
      %27 = dma.hbm_to_vmem [thread:$0]  %s1, 128, %s25, [#allocation3]
    $region9: #{tpu_custom_call.1} parent=1 // pred_fallthru
      _
    // Predicated region
    $region10: #{tpu_custom_call.1} parent=1 // pred_check
      _
    $region11: #{tpu_custom_call.1} parent=1 // pred_check_branch
      %29 = sbr.rel (0) target = $region13
    $region12: #{tpu_custom_call.1} parent=1 // pred_region
      %30 = dma.done [#allocation5], 16
    $region13: #{tpu_custom_call.1} parent=1 // pred_fallthru
      _
    // Predicated region
    $region14: #{tpu_custom_call.1} parent=1 // pred_check
      _
    $region15: #{tpu_custom_call.1} parent=1 // pred_check_branch
      %32 = sbr.rel (0) target = $region17
    $region16: #{tpu_custom_call.1} parent=1 // pred_region
      %33 = dma.done [#allocation3], 128
    $region17: #{tpu_custom_call.1} parent=1 // pred_fallthru
      _
    %34 = sfence
    %s35 = sld [smem:[#allocation2]]
    %s36 = sld [smem:[#allocation2 + $0x1]]
    %v37 = vld [vmem:[#allocation6] ss:$4 sm:$0x3]
    %v38 = vstv %s35
    %v39 = vmul.f32 %v38, %v37
    %s40 = scalar_lea.vmem [#allocation6], 1
    %v41 = vld [vmem:[%s40] ss:$4 sm:$0x3]
    %v42 = vstv %s36
    %v43 = vmul.f32 %v42, %v41
    %v44 = vadd.f32 %v39, %v43
    %s45 = scalar_lea.vmem [#allocation6], 2
    %v46 = vld [vmem:[%s45] ss:$4 sm:$0x3]
    %v47 = vadd.f32 %v44, %v46
    %v48 = vmax.f32 %v47, 0.0
    %s49 = scalar_lea.vmem [#allocation6], 3
    %v50 = vld [vmem:[%s49] ss:$4 sm:$0x3]
    %v51 = vmul.f32 %v48, %v50
    %v53 = vlaneseq
    %v54 = vshrl.u32 %v53, 7
    %v55 = vsub.s32 0, %v54
    %v56 = vrot.slane %v51, %v55
    %v57 = vlaneseq
    %v58 = vshrl.u32 %v57, 7
    %v59 = vsub.s32 1, %v58
    %v60 = vrot.slane %v51, %v59
    %vm63 = vcmask 1040384
    %v64 = vsel %vm63, %v56, 0.0
    %v65 = vsel %vm63, %v60, 0.0
    %v66 = vadd.f32 %v64, %v65
    %67 = vadd.xlane.f32.xlu0 %v66
    %v68 = vpop.xlane.xlu0 %67
    %v69 = vxor.u32 %v68, 2147483648
    %v70 = vmul.f32 %v69, 1.442695
    %v71 = vpow.pop %v70
    %v72 = vadd.f32 %v71, 1.0
    %v73 = vrcp.pop %v72
    %v74 = vmul.f32 1.0, %v73
    %vm75 = vcmask 0
    %76 = vst.msk [vmem:[#allocation7] sm:$0x1] %vm75, %v74
    // Predicated region
    $region18: #{tpu_custom_call.1} parent=1 // pred_check
      _
    $region19: #{tpu_custom_call.1} parent=1 // pred_check_branch
      %78 = sbr.rel (0) target = $region21
    $region20: #{tpu_custom_call.1} parent=1 // pred_region
      %s80 = ssub.s32 16, 16
      %81 = vsyncadd [#allocation4], %s80
      %s83 = sshll.u32 [#allocation7], 4
      %s84 = int_to_ptr.vmem [resolvable:$true] %s83
      %86 = dma.vmem_to_hbm [thread:$0]  %s84, 16, %s2, [#allocation4]
    $region21: #{tpu_custom_call.1} parent=1 // pred_fallthru
      _
    // Predicated region
    $region22: #{tpu_custom_call.1} parent=1 // pred_check
      _
    $region23: #{tpu_custom_call.1} parent=1 // pred_check_branch
      %88 = sbr.rel (0) target = $region25
    $region24: #{tpu_custom_call.1} parent=1 // pred_region
      %89 = dma.done [#allocation4], 16
    $region25: #{tpu_custom_call.1} parent=1 // pred_fallthru
      _
    %90 = vsyncpa [#allocation3], 1
    %91 = vsyncpa [#allocation4], 1
    %92 = vsyncpa [#allocation5], 1

</llo_original>
